<compile_context>
chip_gen: v7x
topology: tpu7x:2x2x1
jax: 0.10.0
libtpu: 0.0.40
codegen_flags: <defaults>
</compile_context>

<pallas_src>
import functools

import jax
import jax.numpy as jnp
from jax.experimental import pallas as pl
from jax.experimental.pallas import tpu as pltpu

SMOOTH = 1e-5


def _dice_kernel(score_ref, target_ref, out_ref, acc_ref, *,
                 apply_softmax, acc_lanes, total_cols, tile_cols, mask_cols):
    # score_ref : (B, C, T)  native dtype -- spatial tile of logits / probs
    # target_ref: (B, 1, T)  int32        -- integer labels for the same tile
    # out_ref   : (1, 3, C)  f32          -- per-slice [intersect, z_sum, y_sum]
    # acc_ref   : (3, C, Lc) f32 VMEM     -- lane-folded running partial sums
    s = pl.program_id(1)

    @pl.when(s == 0)
    def _init():
        acc_ref[...] = jnp.zeros_like(acc_ref)

    score = score_ref[...].astype(jnp.float32)               # (B, C, T)
    tgt = target_ref[...]                                     # (B, 1, T) int32

    if apply_softmax:
        # Fused, numerically-stable channel softmax.  The divide is replaced
        # by an EUP reciprocal on the (B,1,T) denominator (+ one Newton step
        # to recover f32 accuracy) and a cheap VPU broadcast-multiply.
        m = jnp.max(score, axis=1, keepdims=True)             # (B, 1, T)
        e = jnp.exp(score - m)
        denom = jnp.sum(e, axis=1, keepdims=True)             # (B, 1, T)
        inv = pl.reciprocal(denom, approx=True)
        inv = inv * (2.0 - denom * inv)                       # Newton refine
        prob = e * inv
    else:
        prob = score

    if mask_cols:
        # Zero out padded spatial columns (only compiled when padding exists).
        col0 = (pl.program_id(0) * pl.num_programs(1) + s) * tile_cols
        lane = jax.lax.broadcasted_iota(jnp.int32, (1, 1, tile_cols), 2)
        prob = jnp.where(col0 + lane < total_cols, prob, 0.0)

    cls = jax.lax.broadcasted_iota(jnp.int32, prob.shape, 1)  # (B, C, T)
    hit = tgt == cls                                          # bool mask

    def fold(x):
        # (B, C, T) f32 -> (C, acc_lanes): batch reduce + lane tree-fold.
        # All slices start at multiples of 128 -> pure VPU vreg adds, no XLU.
        r = jnp.sum(x, axis=0)
        w = r.shape[-1]
        while w > acc_lanes:
            h = w // 2
            r = r[:, :h] + r[:, h:]
            w = h
        return r

    acc_ref[0] += fold(jnp.where(hit, prob, 0.0))             # intersect
    acc_ref[1] += fold(prob * prob)                           # z_sum
    acc_ref[2] += fold(jnp.where(hit, 1.0, 0.0))              # y_sum

    @pl.when(s == pl.num_programs(1) - 1)
    def _finalize():
        # Single cross-lane reduction per parallel slice.
        out_ref[...] = jnp.sum(acc_ref[...], axis=-1)[None]   # (1, 3, C)


def _round_up(x, m):
    return ((x + m - 1) // m) * m


def _vmem_budget():
    """(tile_budget_bytes, vmem_limit_bytes or None), per TPU generation."""
    kind = ""
    try:
        kind = jax.devices()[0].device_kind.lower()
    except Exception:
        pass
    if "v7" in kind or "7x" in kind:
        # 64 MiB physical / 32 MiB scoped; two TCs each run their own slice.
        return 20 << 20, 30 << 20
    if "v6" in kind:
        # 128 MiB physical / 32 MiB scoped default -> raise the scoped limit.
        return 28 << 20, 48 << 20
    if "v5 lite" in kind or "v5e" in kind:
        return 12 << 20, None          # stay under the 16 MiB scoped default
    return 12 << 20, None              # unknown / older chips: conservative


def _pick_tile(hw_pc, max_cols):
    """Largest multiple of 128 dividing hw_pc and <= max_cols (else full)."""
    if hw_pc % 128 != 0:
        return hw_pc                    # only when hw <= 128 (full-extent block)
    limit = max(min(max_cols, hw_pc), 128)
    best = 128
    t = 256
    while t <= limit:
        if hw_pc % t == 0:
            best = t
        t += 128
    return best


def _acc_lanes(t):
    """Accumulator lane width: tree-halve t down to <=512 (stay mult. of 128)."""
    if t % 128 != 0:
        return t
    lc = t
    while lc > 512 and lc % 256 == 0:
        lc //= 2
    return lc


@functools.partial(jax.jit, static_argnames=("apply_softmax",))
def per_class_dice(inputs, target, *, apply_softmax=False):
    """inputs: (B, C, H, W) float (any dtype); target: (B, H, W) int labels.

    Returns the dice loss per class, shape (C,) float32.
    """
    B, C, H, W = inputs.shape
    hw = H * W
    score = inputs.reshape(B, C, hw)                     # free reshape, native dtype
    # TODO(synk): int8 labels (valid for C<=127) would cut label HBM traffic 4x;
    # kept int32 until the packed (B,1,T) int8 block layout is verified on-chip.
    tgt = target.astype(jnp.int32).reshape(B, 1, hw)

    # --- spatial split: two parallel slices (v7x megacore) when big enough ---
    if hw <= 128:
        ncores, hw_pad = 1, hw
    else:
        ncores = 2 if hw >= 256 else 1
        hw_pad = _round_up(hw, 128 * ncores)
    pad = hw_pad - hw
    if pad:
        score = jnp.pad(score, ((0, 0), (0, 0), (0, pad)))
        # Pad labels with an out-of-range class so padded pixels never match.
        tgt = jnp.pad(tgt, ((0, 0), (0, 0), (0, pad)), constant_values=C)
    hw_pc = hw_pad // ncores

    # --- generation-aware tile budget, with layout padding + temporaries ---
    budget, vmem_limit = _vmem_budget()
    itemsize = jnp.dtype(score.dtype).itemsize
    sub = max((8 * 4) // itemsize, 8)                    # sublane tile: f32 8, bf16 16
    score_col = B * _round_up(C, sub) * itemsize         # bytes/col, sublane-padded
    label_col = B * 8 * 4                                # (B,1,t) i32: sublane 1 -> 8
    tmp_col = 8 * B * _round_up(C, 8) * 4                # ~8 live f32 temps in-kernel
    per_col = 2 * (score_col + label_col) + tmp_col      # 2x = double-buffered inputs
    fixed = 3 * _round_up(C, 8) * 512 * 4 + (1 << 20)    # accumulator + slack
    max_cols = max((budget - fixed) // per_col, 128)

    t = _pick_tile(hw_pc, max_cols)
    lanes = _acc_lanes(t)
    steps = hw_pc // t
    mask_cols = pad > 0

    kernel = functools.partial(
        _dice_kernel, apply_softmax=apply_softmax, acc_lanes=lanes,
        total_cols=hw, tile_cols=t, mask_cols=mask_cols)

    cp = dict(dimension_semantics=("parallel", "arbitrary"))
    if vmem_limit is not None:
        cp["vmem_limit_bytes"] = vmem_limit

    partials = pl.pallas_call(
        kernel,
        out_shape=jax.ShapeDtypeStruct((ncores, 3, C), jnp.float32),
        grid_spec=pltpu.PrefetchScalarGridSpec(
            num_scalar_prefetch=0,
            grid=(ncores, steps),                              # (parallel, reduce)
            in_specs=[
                pl.BlockSpec((B, C, t), lambda p, s: (0, 0, p * steps + s)),
                pl.BlockSpec((B, 1, t), lambda p, s: (0, 0, p * steps + s)),
            ],
            out_specs=pl.BlockSpec((1, 3, C), lambda p, s: (p, 0, 0)),
            scratch_shapes=[pltpu.VMEM((3, C, lanes), jnp.float32)],
        ),
        compiler_params=pltpu.CompilerParams(**cp),
    )(score, tgt)

    totals = jnp.sum(partials, axis=0)                    # (3, C): tiny XLA reduce
    intersect, z_sum, y_sum = totals[0], totals[1], totals[2]
    return 1.0 - (2.0 * intersect + SMOOTH) / (z_sum + y_sum + SMOOTH)


class DiceLoss:
    """JAX/Pallas equivalent of the PyTorch DiceLoss module (forward only)."""

    def __init__(self, n_classes):
        self.n_classes = n_classes

    def __call__(self, inputs, target, weight=None, softmax=False):
        assert inputs.shape[1] == self.n_classes, (
            'predict {} & target one-hot {} shape do not match'.format(
                inputs.shape,
                (inputs.shape[0], self.n_classes) + inputs.shape[2:]))
        dice = per_class_dice(inputs, target, apply_softmax=softmax)   # (C,)
        if weight is None:
            w = jnp.ones((self.n_classes,), jnp.float32)
        else:
            w = jnp.asarray(weight, jnp.float32)
        # Single device array instead of C blocking .item() host syncs.
        class_wise_dice = 1.0 - dice
        loss = jnp.sum(dice * w) / self.n_classes
        return loss, class_wise_dice


def _reference(inputs, target, n_classes, softmax):
    """Pure-JAX reference mirroring the PyTorch code (sanity check)."""
    if softmax:
        inputs = jax.nn.softmax(inputs, axis=1)
    loss = 0.0
    for i in range(n_classes):
        s = inputs[:, i].astype(jnp.float32)
        tm = (target == i).astype(jnp.float32)
        inter = jnp.sum(s * tm)
        y = jnp.sum(tm * tm)
        z = jnp.sum(s * s)
        loss += 1.0 - (2.0 * inter + SMOOTH) / (z + y + SMOOTH)
    return loss / n_classes


if __name__ == "__main__":
    key = jax.random.PRNGKey(0)
    k1, k2, k3, k4 = jax.random.split(key, 4)

    # Case 1: 128-aligned spatial size (exercises the 2-slice parallel grid).
    B, C, H, W = 2, 4, 16, 16
    inputs = jax.random.normal(k1, (B, C, H, W), dtype=jnp.float32)
    target = jax.random.randint(k2, (B, H, W), 0, C, dtype=jnp.int32)

    dice_loss = DiceLoss(n_classes=C)
    loss, class_wise = dice_loss(inputs, target, weight=None, softmax=True)
    loss = jax.block_until_ready(loss)
    class_wise = jax.block_until_ready(class_wise)

    ref = jax.block_until_ready(_reference(inputs, target, C, softmax=True))
    assert abs(float(loss) - float(ref)) < 5e-5, (float(loss), float(ref))
    assert class_wise.shape == (C,)

    # Non-softmax path (inputs already probabilities) must also run and match.
    loss2, _ = dice_loss(jax.nn.softmax(inputs, axis=1), target, softmax=False)
    loss2 = jax.block_until_ready(loss2)
    assert abs(float(loss2) - float(ref)) < 5e-5, (float(loss2), float(ref))

    # Case 2: H*W not a multiple of 128 (exercises pad + column masking).
    B2, C2, H2, W2 = 1, 3, 18, 18
    inputs2 = jax.random.normal(k3, (B2, C2, H2, W2), dtype=jnp.float32)
    target2 = jax.random.randint(k4, (B2, H2, W2), 0, C2, dtype=jnp.int32)
    loss3, _ = DiceLoss(n_classes=C2)(inputs2, target2, softmax=True)
    loss3 = jax.block_until_ready(loss3)
    ref3 = jax.block_until_ready(_reference(inputs2, target2, C2, softmax=True))
    assert abs(float(loss3) - float(ref3)) < 5e-5, (float(loss3), float(ref3))

    print("KERNEL_OK")
</pallas_src>

<mosaic_0001>
module attributes {stable_mosaic.version = 11 : i64} {
  func.func @_dice_kernel(%arg0: i32, %arg1: i32, %arg2: memref<2x4x128xf32, #tpu.memory_space<vmem>>, %arg3: memref<2x1x128xi32, #tpu.memory_space<vmem>>, %arg4: memref<1x3x4xf32, #tpu.memory_space<vmem>>, %arg5: memref<3x4x128xf32, #tpu.memory_space<vmem>>) attributes {dimension_semantics = [#tpu.dimension_semantics<parallel>, #tpu.dimension_semantics<arbitrary>], iteration_bounds = array<i64: 2, 1>, scalar_prefetch = 0 : i64, scratch_operands = 1 : i64, tpu.core_type = #tpu.core_type<tc>, window_params = [{transform_indices = @transform_0, window_bounds = array<i64: 2, 4, 128>}, {transform_indices = @transform_1, window_bounds = array<i64: 2, 1, 128>}, {transform_indices = @transform_2, window_bounds = array<i64: 1, 3, 4>}]} {
    %c0_i32 = arith.constant 0 : i32
    %0 = arith.cmpi eq, %arg1, %c0_i32 : i32
    %1 = arith.extui %0 : i1 to i32
    %c0_i32_0 = arith.constant 0 : i32
    %2 = arith.cmpi ne, %1, %c0_i32_0 : i32
    scf.if %2 {
      %cst_32 = arith.constant 0.000000e+00 : f32
      %52 = vector.broadcast %cst_32 : f32 to vector<3x4x128xf32>
      %c0_33 = arith.constant 0 : index
      %c0_34 = arith.constant 0 : index
      %c0_35 = arith.constant 0 : index
      %53 = vector.load %arg5[%c0_33, %c0_34, %c0_35] : memref<3x4x128xf32, #tpu.memory_space<vmem>>, vector<3x4x128xf32>
      tpu.vector_store %arg5[%c0_33, %c0_34, %c0_35], %52 {strides = array<i32>} : memref<3x4x128xf32, #tpu.memory_space<vmem>>, vector<3x4x128xf32>,
    } else {
    }
    %c0 = arith.constant 0 : index
    %c0_1 = arith.constant 0 : index
    %c0_2 = arith.constant 0 : index
    %3 = vector.load %arg2[%c0, %c0_1, %c0_2] : memref<2x4x128xf32, #tpu.memory_space<vmem>>, vector<2x4x128xf32>
    %c0_3 = arith.constant 0 : index
    %c0_4 = arith.constant 0 : index
    %c0_5 = arith.constant 0 : index
    %4 = vector.load %arg3[%c0_3, %c0_4, %c0_5] : memref<2x1x128xi32, #tpu.memory_space<vmem>>, vector<2x1x128xi32>
    %cst = arith.constant dense<0xFF800000> : vector<2x128xf32>
    %5 = vector.multi_reduction <maximumf>, %3, %cst [1] : vector<2x4x128xf32> to vector<2x128xf32>
    %6 = vector.shape_cast %5 : vector<2x128xf32> to vector<2x1x128xf32>
    %7 = vector.broadcast %6 : vector<2x1x128xf32> to vector<2x4x128xf32>
    %8 = arith.subf %3, %7 : vector<2x4x128xf32>
    %9 = math.exp %8 : vector<2x4x128xf32>
    %cst_6 = arith.constant dense<0.000000e+00> : vector<2x128xf32>
    %10 = vector.multi_reduction <add>, %9, %cst_6 [1] : vector<2x4x128xf32> to vector<2x128xf32>
    %11 = vector.shape_cast %10 : vector<2x128xf32> to vector<2x1x128xf32>
    %12 = tpu.reciprocal %11 {approx = true} : vector<2x1x128xf32> -> vector<2x1x128xf32>
    %13 = arith.mulf %11, %12 : vector<2x1x128xf32>
    %cst_7 = arith.constant 2.000000e+00 : f32
    %14 = vector.broadcast %cst_7 : f32 to vector<2x1x128xf32>
    %15 = arith.subf %14, %13 : vector<2x1x128xf32>
    %16 = arith.mulf %12, %15 : vector<2x1x128xf32>
    %17 = vector.broadcast %16 : vector<2x1x128xf32> to vector<2x4x128xf32>
    %18 = arith.mulf %9, %17 : vector<2x4x128xf32>
    %19 = tpu.iota {dimensions = array<i32: 1>} : vector<2x4x128xi32>
    %20 = vector.broadcast %4 : vector<2x1x128xi32> to vector<2x4x128xi32>
    %21 = arith.cmpi eq, %20, %19 : vector<2x4x128xi32>
    %c0_8 = arith.constant 0 : index
    %c0_9 = arith.constant 0 : index
    %c0_10 = arith.constant 0 : index
    %22 = vector.load %arg5[%c0_8, %c0_9, %c0_10] : memref<3x4x128xf32, #tpu.memory_space<vmem>>, vector<1x4x128xf32>
    %23 = vector.shape_cast %22 : vector<1x4x128xf32> to vector<4x128xf32>
    %cst_11 = arith.constant 0.000000e+00 : f32
    %24 = vector.broadcast %cst_11 : f32 to vector<2x4x128xf32>
    %25 = arith.select %21, %18, %24 : vector<2x4x128xi1>, vector<2x4x128xf32>
    %cst_12 = arith.constant dense<0.000000e+00> : vector<4x128xf32>
    %26 = vector.multi_reduction <add>, %25, %cst_12 [0] : vector<2x4x128xf32> to vector<4x128xf32>
    %27 = arith.addf %23, %26 : vector<4x128xf32>
    %c0_13 = arith.constant 0 : index
    %c0_14 = arith.constant 0 : index
    %c0_15 = arith.constant 0 : index
    %28 = vector.load %arg5[%c0_13, %c0_14, %c0_15] : memref<3x4x128xf32, #tpu.memory_space<vmem>>, vector<1x4x128xf32>
    %29 = vector.shape_cast %28 : vector<1x4x128xf32> to vector<4x128xf32>
    %30 = vector.shape_cast %27 : vector<4x128xf32> to vector<1x4x128xf32>
    tpu.vector_store %arg5[%c0_13, %c0_14, %c0_15], %30 {strides = array<i32>} : memref<3x4x128xf32, #tpu.memory_space<vmem>>, vector<1x4x128xf32>,
    %c1 = arith.constant 1 : index
    %c0_16 = arith.constant 0 : index
    %c0_17 = arith.constant 0 : index
    %31 = vector.load %arg5[%c1, %c0_16, %c0_17] : memref<3x4x128xf32, #tpu.memory_space<vmem>>, vector<1x4x128xf32>
    %32 = vector.shape_cast %31 : vector<1x4x128xf32> to vector<4x128xf32>
    %33 = arith.mulf %18, %18 : vector<2x4x128xf32>
    %cst_18 = arith.constant dense<0.000000e+00> : vector<4x128xf32>
    %34 = vector.multi_reduction <add>, %33, %cst_18 [0] : vector<2x4x128xf32> to vector<4x128xf32>
    %35 = arith.addf %32, %34 : vector<4x128xf32>
    %c1_19 = arith.constant 1 : index
    %c0_20 = arith.constant 0 : index
    %c0_21 = arith.constant 0 : index
    %36 = vector.load %arg5[%c1_19, %c0_20, %c0_21] : memref<3x4x128xf32, #tpu.memory_space<vmem>>, vector<1x4x128xf32>
    %37 = vector.shape_cast %36 : vector<1x4x128xf32> to vector<4x128xf32>
    %38 = vector.shape_cast %35 : vector<4x128xf32> to vector<1x4x128xf32>
    tpu.vector_store %arg5[%c1_19, %c0_20, %c0_21], %38 {strides = array<i32>} : memref<3x4x128xf32, #tpu.memory_space<vmem>>, vector<1x4x128xf32>,
    %c2 = arith.constant 2 : index
    %c0_22 = arith.constant 0 : index
    %c0_23 = arith.constant 0 : index
    %39 = vector.load %arg5[%c2, %c0_22, %c0_23] : memref<3x4x128xf32, #tpu.memory_space<vmem>>, vector<1x4x128xf32>
    %40 = vector.shape_cast %39 : vector<1x4x128xf32> to vector<4x128xf32>
    %cst_24 = arith.constant 1.000000e+00 : f32
    %cst_25 = arith.constant 0.000000e+00 : f32
    %41 = vector.broadcast %cst_24 : f32 to vector<2x4x128xf32>
    %42 = vector.broadcast %cst_25 : f32 to vector<2x4x128xf32>
    %43 = arith.select %21, %41, %42 : vector<2x4x128xi1>, vector<2x4x128xf32>
    %cst_26 = arith.constant dense<0.000000e+00> : vector<4x128xf32>
    %44 = vector.multi_reduction <add>, %43, %cst_26 [0] : vector<2x4x128xf32> to vector<4x128xf32>
    %45 = arith.addf %40, %44 : vector<4x128xf32>
    %c2_27 = arith.constant 2 : index
    %c0_28 = arith.constant 0 : index
    %c0_29 = arith.constant 0 : index
    %46 = vector.load %arg5[%c2_27, %c0_28, %c0_29] : memref<3x4x128xf32, #tpu.memory_space<vmem>>, vector<1x4x128xf32>
    %47 = vector.shape_cast %46 : vector<1x4x128xf32> to vector<4x128xf32>
    %48 = vector.shape_cast %45 : vector<4x128xf32> to vector<1x4x128xf32>
    tpu.vector_store %arg5[%c2_27, %c0_28, %c0_29], %48 {strides = array<i32>} : memref<3x4x128xf32, #tpu.memory_space<vmem>>, vector<1x4x128xf32>,
    %c0_i32_30 = arith.constant 0 : i32
    %49 = arith.cmpi eq, %arg1, %c0_i32_30 : i32
    %50 = arith.extui %49 : i1 to i32
    %c0_i32_31 = arith.constant 0 : i32
    %51 = arith.cmpi ne, %50, %c0_i32_31 : i32
    scf.if %51 {
      %c0_32 = arith.constant 0 : index
      %c0_33 = arith.constant 0 : index
      %c0_34 = arith.constant 0 : index
      %52 = vector.load %arg5[%c0_32, %c0_33, %c0_34] : memref<3x4x128xf32, #tpu.memory_space<vmem>>, vector<3x4x128xf32>
      %cst_35 = arith.constant dense<0.000000e+00> : vector<3x4xf32>
      %53 = vector.multi_reduction <add>, %52, %cst_35 [2] : vector<3x4x128xf32> to vector<3x4xf32>
      %54 = vector.shape_cast %53 : vector<3x4xf32> to vector<1x3x4xf32>
      %c0_36 = arith.constant 0 : index
      %c0_37 = arith.constant 0 : index
      %c0_38 = arith.constant 0 : index
      %55 = vector.load %arg4[%c0_36, %c0_37, %c0_38] : memref<1x3x4xf32, #tpu.memory_space<vmem>>, vector<1x3x4xf32>
      tpu.vector_store %arg4[%c0_36, %c0_37, %c0_38], %54 {strides = array<i32>} : memref<1x3x4xf32, #tpu.memory_space<vmem>>, vector<1x3x4xf32>,
    } else {
    }
    return
  }
  func.func @transform_0(%arg0: i32, %arg1: i32) -> (i32, i32, i32) {
    %c1_i32 = arith.constant 1 : i32
    %0 = arith.muli %arg0, %c1_i32 : i32
    %1 = arith.addi %0, %arg1 : i32
    %c0_i32 = arith.constant 0 : i32
    %c0_i32_0 = arith.constant 0 : i32
    %c0_i32_1 = arith.constant 0 : i32
    return %c0_i32, %c0_i32_0, %1 : i32, i32, i32
  }
  func.func @transform_1(%arg0: i32, %arg1: i32) -> (i32, i32, i32) {
    %c1_i32 = arith.constant 1 : i32
    %0 = arith.muli %arg0, %c1_i32 : i32
    %1 = arith.addi %0, %arg1 : i32
    %c0_i32 = arith.constant 0 : i32
    %c0_i32_0 = arith.constant 0 : i32
    %c0_i32_1 = arith.constant 0 : i32
    return %c0_i32, %c0_i32_0, %1 : i32, i32, i32
  }
  func.func @transform_2(%arg0: i32, %arg1: i32) -> (i32, i32, i32) {
    %c0_i32 = arith.constant 0 : i32
    %c0_i32_0 = arith.constant 0 : i32
    %c0_i32_1 = arith.constant 0 : i32
    return %arg0, %c0_i32, %c0_i32_0 : i32, i32, i32
  }
}

</mosaic_0001>

<llo_original>
// kernel: per_class_dice.1
$region0: #{per_class_dice.1}
  #allocation0 [shape = 'u32[]', space=smem, size = 0x4, offset = 0x4, fixed_abs, tag = 'smem constant byte address 0x4 - core index']
  #allocation1 [shape = 'u32[144,128]{1,0:T(1,128)}', space=vmem, size = 0x12000, scoped, tag = 'internal scratch']
  #allocation2 [shape = 'f32[3,4,128]{2,1,0:T(4,128)}', space=vmem, size = 0x1800, scoped, tag = 'scratch operand']
  %s0 = inlined_call_operand.vmem [shape: f32[2,4,256], index: 0, kind: input, shape index: {}]
  %s1 = inlined_call_operand.vmem [shape: s32[2,1,256], index: 1, kind: input, shape index: {}]
  %s2 = inlined_call_operand.vmem [shape: f32[2,3,4], index: 2, kind: output, shape index: {}]
  %s3 = sld [smem:[#allocation0]]
  $region124: #{per_class_dice.1} parent=0
    _
  %s5 = ssub.s32 1, %s3
  %s6 = scalar_select 0, %s5, %s3
  $region1: #{per_class_dice.1} parent=0
    #allocation3 [shape = 'u8[8192]{0}', space=vmem, size = 0x2000, scoped, tag = 'input window, operand 0']
    #allocation4 [shape = 'u8[2048]{0}', space=vmem, size = 0x800, scoped, tag = 'input window, operand 1']
    loop: start=0, step=1, limit=4
    $region2: #{per_class_dice.1} parent=1 // loop_pre_header
      _
    $region3: #{per_class_dice.1} parent=1 // loop_header
      %s8 = sphi 0, %s12
      %p9 = scmp.ge.s32.totalorder %s8, 4
      %s15 = sphi 0, %s27
      %s16 = sphi 0, %s23
      %s17 = sphi 0, %s15
      %s18 = sphi 0, %s16
      %s19 = sphi 0, %s17
      %s20 = sphi 0, %s18
      %s32 = sphi 0, %s34
      %s35 = sphi 0, %s32
      %s36 = sphi 0, %s35
      %s52 = sphi 0, %s36
      %s60 = sphi 0, %s62
      %s63 = sphi 0, %s60
      %s64 = sphi 0, %s63
      %s80 = sphi 0, %s64
      %s86 = sphi 0, %s88
      %s89 = sphi 0, %s86
      %s90 = sphi 0, %s89
      %s106 = sphi 0, %s90
    $region4: #{per_class_dice.1} parent=1 // loop_header_branch
      %11 = sbr.rel (%p9) target = $region8
    $region5: #{per_class_dice.1} parent=1 // loop_body
      %s13 = ssub.s32 %s8, 1
      %s14 = ssub.s32 %s8, 2
      %s21 = sadd.s32 1, %s16
      %p22 = scmp.ge.s32.totalorder %s21, 1
      %s23 = scalar_select %p22, 0, %s21
      %s24 = sadd.s32 1, %s15
      %s25 = scalar_select %p22, %s24, %s15
      %p26 = scmp.ge.s32.totalorder %s25, 2
      %s27 = scalar_select %p26, 0, %s25
      %s28 = sadd.s32 %s15, %s16
      %s29 = sadd.s32 %s27, %s23
      %s30 = ssub.s32 %s28, %s29
      %p31 = scmp.eq.s32.totalorder %s30, 0
      %s33 = sadd.s32 %s32, 1
      %s34 = scalar_select %p31, %s32, %s33
      %p37 = pneg %p31
      %p38 = scmp.eq.s32.totalorder %s8, 1
      %p39 = por %p37, %p38
      %p40 = scmp.ne.s32.totalorder %s32, %s35
      %p41 = scmp.eq.s32.totalorder %s8, 0
      %p42 = por %p40, %p41
      %p43 = scmp.ne.s32.totalorder %s32, %s35
      %p44 = scmp.eq.s32.totalorder %s13, 1
      %p45 = por %p43, %p44
      %p46 = scmp.ne.s32.totalorder %s35, %s36
      %p47 = scmp.eq.s32.totalorder %s13, 0
      %p48 = por %p46, %p47
      %p49 = scmp.ne.s32.totalorder %s35, %s36
      %p50 = scmp.eq.s32.totalorder %s14, 1
      %p51 = por %p49, %p50
      %p53 = scmp.ne.s32.totalorder %s36, %s52
      %p54 = scmp.eq.s32.totalorder %s14, 0
      %p55 = por %p53, %p54
      %s56 = sadd.s32 %s15, %s16
      %s57 = sadd.s32 %s27, %s23
      %s58 = ssub.s32 %s56, %s57
      %p59 = scmp.eq.s32.totalorder %s58, 0
      %s61 = sadd.s32 %s60, 1
      %s62 = scalar_select %p59, %s60, %s61
      %p65 = pneg %p59
      %p66 = scmp.eq.s32.totalorder %s8, 1
      %p67 = por %p65, %p66
      %p68 = scmp.ne.s32.totalorder %s60, %s63
      %p69 = scmp.eq.s32.totalorder %s8, 0
      %p70 = por %p68, %p69
      %p71 = scmp.ne.s32.totalorder %s60, %s63
      %p72 = scmp.eq.s32.totalorder %s13, 1
      %p73 = por %p71, %p72
      %p74 = scmp.ne.s32.totalorder %s63, %s64
      %p75 = scmp.eq.s32.totalorder %s13, 0
      %p76 = por %p74, %p75
      %p77 = scmp.ne.s32.totalorder %s63, %s64
      %p78 = scmp.eq.s32.totalorder %s14, 1
      %p79 = por %p77, %p78
      %p81 = scmp.ne.s32.totalorder %s64, %s80
      %p82 = scmp.eq.s32.totalorder %s14, 0
      %p83 = por %p81, %p82
      %s84 = ssub.s32 %s15, %s27
      %p85 = scmp.eq.s32.totalorder %s84, 0
      %s87 = sadd.s32 %s86, 1
      %s88 = scalar_select %p85, %s86, %s87
      %p91 = pneg %p85
      %p92 = scmp.eq.s32.totalorder %s8, 1
      %p93 = por %p91, %p92
      %p94 = scmp.ne.s32.totalorder %s86, %s89
      %p95 = scmp.eq.s32.totalorder %s8, 0
      %p96 = por %p94, %p95
      %p97 = scmp.ne.s32.totalorder %s86, %s89
      %p98 = scmp.eq.s32.totalorder %s13, 1
      %p99 = por %p97, %p98
      %p100 = scmp.ne.s32.totalorder %s89, %s90
      %p101 = scmp.eq.s32.totalorder %s13, 0
      %p102 = por %p100, %p101
      %p103 = scmp.ne.s32.totalorder %s89, %s90
      %p104 = scmp.eq.s32.totalorder %s14, 1
      %p105 = por %p103, %p104
      %p107 = scmp.ne.s32.totalorder %s90, %s106
      %p108 = scmp.eq.s32.totalorder %s14, 0
      %p109 = por %p107, %p108
      %p110 = scmp.le.s32.totalorder 1, %s8
      %p111 = scmp.lt.s32.totalorder %s8, 3
      %p112 = pnand %p110, %p111
      %p113 = pneg %p112
      // Predicated region
      $region9: #{per_class_dice.1} parent=5 // pred_check
        _
      $region10: #{per_class_dice.1} parent=5 // pred_check_branch
        %115 = sbr.rel (%p112) target = $region12
      $region11: #{per_class_dice.1} parent=5 // pred_region
        %s116 = ssub.s32 %s8, 1
      $region12: #{per_class_dice.1} parent=5 // pred_fallthru
        _
      %p117 = scmp.lt.s32.totalorder %s8, 2
      // Predicated region
      $region13: #{per_class_dice.1} parent=5 // pred_check
        %p118 = pneg %p117
      $region14: #{per_class_dice.1} parent=5 // pred_check_branch
        %120 = sbr.rel (%p118) target = $region16
      $region15: #{per_class_dice.1} parent=5 // pred_region
        // Predicated region
        $region17: #{per_class_dice.1} parent=15 // pred_check
          %p121 = pneg %p42
        $region18: #{per_class_dice.1} parent=15 // pred_check_branch
          %123 = sbr.rel (%p121) target = $region20
        $region19: #{per_class_dice.1} parent=15 // pred_region
          %s124 = sand.u32 %s32, 1
          %s125 = sand.u32 %s32, 1
          %s126 = smul.addr %s125, 8
          %s127 = scalar_lea.vmem [#allocation3], %s126
          %s128 = sadd.s32 %s15, %s16
          %s129 = smul.addr %s128, 4
          %s130 = scalar_lea.vmem %s0, %s129
          // Predicated region
          $region21: #{per_class_dice.1} parent=19 // pred_check
            _
          $region22: #{per_class_dice.1} parent=19 // pred_check_branch
            %132 = sbr.rel (0) target = $region24
          $region23: #{per_class_dice.1} parent=19 // pred_region
            // Predicated region
            $region25: #{per_class_dice.1} parent=23 // pred_check
              _
            $region26: #{per_class_dice.1} parent=23 // pred_check_branch
              %134 = sbr.rel target = $region28
            $region27: #{per_class_dice.1} parent=23 // pred_region
              // Predicated region
              $region40: #{per_class_dice.1} parent=27 // pred_check
                _
              $region41: #{per_class_dice.1} parent=27 // pred_check_branch
                %151 = sbr.rel (0) target = $region43
              $region42: #{per_class_dice.1} parent=27 // pred_region
                loop: start=0, step=1, limit=1
                $region44: #{per_class_dice.1} parent=42 // loop_pre_header
                  _
                $region45: #{per_class_dice.1} parent=42 // loop_header
                  %s153 = sphi 0, %s157
                  %p154 = scmp.ge.s32.totalorder %s153, 1
                  %s158 = sphi %s130, %s130
                  %s159 = sphi %s127, %s127
                $region46: #{per_class_dice.1} parent=42 // loop_header_branch
                  %156 = sbr.rel (%p154) target = $region50
                $region47: #{per_class_dice.1} parent=42 // loop_body
                  _
                $region48: #{per_class_dice.1} parent=42 // loop_footer
                  %s157 = sadd.s32 1, %s153
                $region49: #{per_class_dice.1} parent=42 // loop_footer_branch
                  %152 = sbr.rel target = $region45
                $region50: #{per_class_dice.1} parent=42 // loop_exit
                  _
                loop: start=0, step=1, limit=1
                $region51: #{per_class_dice.1} parent=42 // loop_pre_header
                  _
                $region52: #{per_class_dice.1} parent=42 // loop_header
                  %s162 = sphi 0, %s166
                  %p163 = scmp.ge.s32.totalorder %s162, 1
                  %s167 = sphi %s130, %s130
                  %s168 = sphi %s127, %s127
                $region53: #{per_class_dice.1} parent=42 // loop_header_branch
                  %165 = sbr.rel (%p163) target = $region57
                $region54: #{per_class_dice.1} parent=42 // loop_body
                  %v169 = vld [vmem:[%s167] sm:$0xf]
                  %170 = vst [vmem:[%s168] sm:$0xf] %v169
                  %v171 = vld [vmem:[%s167 + $0x8] sm:$0xf]
                  %172 = vst [vmem:[%s168 + $0x4] sm:$0xf] %v171
                $region55: #{per_class_dice.1} parent=42 // loop_footer
                  %s166 = sadd.s32 1, %s162
                $region56: #{per_class_dice.1} parent=42 // loop_footer_branch
                  %161 = sbr.rel target = $region52
                $region57: #{per_class_dice.1} parent=42 // loop_exit
                  _
              $region43: #{per_class_dice.1} parent=27 // pred_fallthru
                _
            $region28: #{per_class_dice.1} parent=23 // pred_fallthru
              _
            // Predicated region
            $region29: #{per_class_dice.1} parent=23 // pred_check
              _
            $region30: #{per_class_dice.1} parent=23 // pred_check_branch
              %136 = sbr.rel (0) target = $region32
            $region31: #{per_class_dice.1} parent=23 // pred_region
              loop: start=0, step=1, limit=1
              $region33: #{per_class_dice.1} parent=31 // loop_pre_header
                _
              $region34: #{per_class_dice.1} parent=31 // loop_header
                %s139 = sphi 0, %s143
                %p140 = scmp.ge.s32.totalorder %s139, 1
                %s144 = sphi %s130, %s130
                %s145 = sphi %s127, %s127
              $region35: #{per_class_dice.1} parent=31 // loop_header_branch
                %142 = sbr.rel (%p140) target = $region39
              $region36: #{per_class_dice.1} parent=31 // loop_body
                %v146 = vld [vmem:[%s144] sm:$0xf]
                %147 = vst [vmem:[%s145] sm:$0xf] %v146
                %v148 = vld [vmem:[%s144 + $0x8] sm:$0xf]
                %149 = vst [vmem:[%s145 + $0x4] sm:$0xf] %v148
              $region37: #{per_class_dice.1} parent=31 // loop_footer
                %s143 = sadd.s32 1, %s139
              $region38: #{per_class_dice.1} parent=31 // loop_footer_branch
                %138 = sbr.rel target = $region34
              $region39: #{per_class_dice.1} parent=31 // loop_exit
                _
            $region32: #{per_class_dice.1} parent=23 // pred_fallthru
              _
          $region24: #{per_class_dice.1} parent=19 // pred_fallthru
            _
          %173 = vnop
        $region20: #{per_class_dice.1} parent=15 // pred_fallthru
          _
        // Predicated region
        $region58: #{per_class_dice.1} parent=15 // pred_check
          %p174 = pneg %p70
        $region59: #{per_class_dice.1} parent=15 // pred_check_branch
          %176 = sbr.rel (%p174) target = $region61
        $region60: #{per_class_dice.1} parent=15 // pred_region
          %s177 = sand.u32 %s60, 1
          %s178 = sand.u32 %s60, 1
          %s179 = smul.addr %s178, 2
          %s180 = scalar_lea.vmem [#allocation4], %s179
          %s181 = sadd.s32 %s15, %s16
          %s182 = scalar_lea.vmem %s1, %s181
          // Predicated region
          $region62: #{per_class_dice.1} parent=60 // pred_check
            _
          $region63: #{per_class_dice.1} parent=60 // pred_check_branch
            %184 = sbr.rel (0) target = $region65
          $region64: #{per_class_dice.1} parent=60 // pred_region
            // Predicated region
            $region66: #{per_class_dice.1} parent=64 // pred_check
              _
            $region67: #{per_class_dice.1} parent=64 // pred_check_branch
              %186 = sbr.rel target = $region69
            $region68: #{per_class_dice.1} parent=64 // pred_region
              // Predicated region
              $region81: #{per_class_dice.1} parent=68 // pred_check
                _
              $region82: #{per_class_dice.1} parent=68 // pred_check_branch
                %203 = sbr.rel (0) target = $region84
              $region83: #{per_class_dice.1} parent=68 // pred_region
                loop: start=0, step=1, limit=1
                $region85: #{per_class_dice.1} parent=83 // loop_pre_header
                  _
                $region86: #{per_class_dice.1} parent=83 // loop_header
                  %s206 = sphi 0, %s210
                  %p207 = scmp.ge.s32.totalorder %s206, 1
                  %s211 = sphi %s182, %s182
                  %s212 = sphi %s180, %s180
                $region87: #{per_class_dice.1} parent=83 // loop_header_branch
                  %209 = sbr.rel (%p207) target = $region91
                $region88: #{per_class_dice.1} parent=83 // loop_body
                  %v213 = vld [vmem:[%s211] sm:$0x1]
                  %214 = vst [vmem:[%s212] sm:$0x1] %v213
                  %v215 = vld [vmem:[%s211 + $0x2] sm:$0x1]
                  %216 = vst [vmem:[%s212 + $0x1] sm:$0x1] %v215
                $region89: #{per_class_dice.1} parent=83 // loop_footer
                  %s210 = sadd.s32 1, %s206
                $region90: #{per_class_dice.1} parent=83 // loop_footer_branch
                  %205 = sbr.rel target = $region86
                $region91: #{per_class_dice.1} parent=83 // loop_exit
                  _
              $region84: #{per_class_dice.1} parent=68 // pred_fallthru
                _
            $region69: #{per_class_dice.1} parent=64 // pred_fallthru
              _
            // Predicated region
            $region70: #{per_class_dice.1} parent=64 // pred_check
              _
            $region71: #{per_class_dice.1} parent=64 // pred_check_branch
              %188 = sbr.rel (0) target = $region73
            $region72: #{per_class_dice.1} parent=64 // pred_region
              loop: start=0, step=1, limit=1
              $region74: #{per_class_dice.1} parent=72 // loop_pre_header
                _
              $region75: #{per_class_dice.1} parent=72 // loop_header
                %s191 = sphi 0, %s195
                %p192 = scmp.ge.s32.totalorder %s191, 1
                %s196 = sphi %s182, %s182
                %s197 = sphi %s180, %s180
              $region76: #{per_class_dice.1} parent=72 // loop_header_branch
                %194 = sbr.rel (%p192) target = $region80
              $region77: #{per_class_dice.1} parent=72 // loop_body
                %v198 = vld [vmem:[%s196] sm:$0x1]
                %199 = vst [vmem:[%s197] sm:$0x1] %v198
                %v200 = vld [vmem:[%s196 + $0x2] sm:$0x1]
                %201 = vst [vmem:[%s197 + $0x1] sm:$0x1] %v200
              $region78: #{per_class_dice.1} parent=72 // loop_footer
                %s195 = sadd.s32 1, %s191
              $region79: #{per_class_dice.1} parent=72 // loop_footer_branch
                %190 = sbr.rel target = $region75
              $region80: #{per_class_dice.1} parent=72 // loop_exit
                _
            $region73: #{per_class_dice.1} parent=64 // pred_fallthru
              _
          $region65: #{per_class_dice.1} parent=60 // pred_fallthru
            _
          %217 = vnop
        $region61: #{per_class_dice.1} parent=15 // pred_fallthru
          _
      $region16: #{per_class_dice.1} parent=5 // pred_fallthru
        _
      %p218 = scmp.le.s32.totalorder 1, %s8
      %p219 = scmp.lt.s32.totalorder %s8, 3
      %p220 = pnand %p218, %p219
      %p221 = pneg %p220
      // Predicated region
      $region92: #{per_class_dice.1} parent=5 // pred_check
        _
      $region93: #{per_class_dice.1} parent=5 // pred_check_branch
        %223 = sbr.rel (%p220) target = $region95
      $region94: #{per_class_dice.1} parent=5 // pred_region
        %s224 = ssub.s32 %s8, 1
        %s225 = sand.u32 %s35, 1
        %s226 = sand.u32 %s35, 1
        %s227 = smul.addr %s226, 8
        %s228 = scalar_lea.vmem [#allocation3], %s227
        // Predicated region
        $region96: #{per_class_dice.1} parent=94 // pred_check
          %p229 = pneg %p48
        $region97: #{per_class_dice.1} parent=94 // pred_check_branch
          %231 = sbr.rel (%p229) target = $region99
        $region98: #{per_class_dice.1} parent=94 // pred_region
          _
        $region99: #{per_class_dice.1} parent=94 // pred_fallthru
          _
        %s232 = sand.u32 %s63, 1
        %s233 = sand.u32 %s63, 1
        %s234 = smul.addr %s233, 2
        %s235 = scalar_lea.vmem [#allocation4], %s234
        // Predicated region
        $region100: #{per_class_dice.1} parent=94 // pred_check
          %p236 = pneg %p76
        $region101: #{per_class_dice.1} parent=94 // pred_check_branch
          %238 = sbr.rel (%p236) target = $region103
        $region102: #{per_class_dice.1} parent=94 // pred_region
          _
        $region103: #{per_class_dice.1} parent=94 // pred_fallthru
          _
        %s239 = sand.u32 %s35, 1
        %s240 = sand.u32 %s35, 1
        %s241 = smul.addr %s240, 8
        %s242 = scalar_lea.vmem [#allocation3], %s241
        %p243 = pneg %p48
        %p244 = pneg %p45
        %s245 = sand.u32 %s63, 1
        %s246 = sand.u32 %s63, 1
        %s247 = smul.addr %s246, 2
        %s248 = scalar_lea.vmem [#allocation4], %s247
        %p249 = pneg %p76
        %p250 = pneg %p73
        %p251 = pneg %p102
        %p252 = pneg %p99
        %p253 = scmp.lt.s32.totalorder %s17, 1
        %s254 = scalar_select %p253, %s17, 1
        %s255 = smul.addr %s254, 4
        %s256 = scalar_lea.vmem %s2, %s255
        %s257 = sadd.s32 %s17, %s18
        %s258 = sadd.s32 %s17, %s18
        %p259 = scmp.lt.s32.totalorder %s17, 1
        %s260 = scalar_select %p259, %s17, 1
        %s261 = smul.addr %s260, 4
        %s262 = scalar_lea.vmem %s2, %s261
        %p263 = scmp.eq.s32.totalorder %s18, 0
        // Predicated region
        $region104: #{per_class_dice.1} parent=94 // pred_check
          %p264 = pneg %p263
        $region105: #{per_class_dice.1} parent=94 // pred_check_branch
          %266 = sbr.rel (%p264) target = $region107
        $region106: #{per_class_dice.1} parent=94 // pred_region
          %267 = vst [vmem:[#allocation2] sm:$0xf] 0.0
          %268 = vst [vmem:[#allocation2 + $0x4] sm:$0xf] 0.0
          %269 = vst [vmem:[#allocation2 + $0x8] sm:$0xf] 0.0
        $region107: #{per_class_dice.1} parent=94 // pred_fallthru
          _
        %v270 = vld [vmem:[%s228] sm:$0xf]
        %v271 = vld [vmem:[%s228 + $0x4] sm:$0xf]
        %v272 = vld [vmem:[%s235] sm:$0x1]
        %v273 = vld [vmem:[%s235 + $0x1] sm:$0x1]
        %vm274 = vcmask 1043456
        %v275 = vsel %vm274, %v270, -inf
        %v276 = vrot.slane %v275, 4
        %v277 = vmax.f32 %v275, %v276
        %v278 = vrot.slane %v277, 2
        %v279 = vmax.f32 %v277, %v278
        %v280 = vrot.slane %v279, 1
        %v281 = vmax.f32 %v279, %v280
        %v282 = vsel %vm274, %v271, -inf
        %v283 = vrot.slane %v282, 4
        %v284 = vmax.f32 %v282, %v283
        %v285 = vrot.slane %v284, 2
        %v286 = vmax.f32 %v284, %v285
        %v287 = vrot.slane %v286, 1
        %v288 = vmax.f32 %v286, %v287
        %v289 = vsub.f32 %v270, %v281
        %v290 = vsub.f32 %v271, %v288
        %v291 = vmul.f32 %v289, 1.442695
        %v292 = vpow.pop %v291
        %v293 = vmul.f32 %v290, 1.442695
        %v294 = vpow.pop %v293
        %v295 = vsel %vm274, %v292, 0.0
        %v296 = vrot.slane %v295, 4
        %v297 = vadd.f32 %v295, %v296
        %v298 = vrot.slane %v297, 2
        %v299 = vadd.f32 %v297, %v298
        %v300 = vrot.slane %v299, 1
        %v301 = vadd.f32 %v299, %v300
        %v302 = vsel %vm274, %v294, 0.0
        %v303 = vrot.slane %v302, 4
        %v304 = vadd.f32 %v302, %v303
        %v305 = vrot.slane %v304, 2
        %v306 = vadd.f32 %v304, %v305
        %v307 = vrot.slane %v306, 1
        %v308 = vadd.f32 %v306, %v307
        %v309 = vrcp.pop %v301
        %v310 = vrcp.pop %v308
        %v311 = vmul.f32 %v301, %v309
        %v312 = vmul.f32 %v308, %v310
        %v313 = vsub.f32 2.0, %v311
        %v314 = vsub.f32 2.0, %v312
        %v315 = vmul.f32 %v309, %v313
        %v316 = vmul.f32 %v310, %v314
        %v317 = vmul.f32 %v292, %v315
        %v318 = vmul.f32 %v294, %v316
        %v319 = vlaneseq
        %v320 = vshrl.u32 %v319, 7
        %v321 = vlaneseq
        %v322 = vshrl.u32 %v321, 7
        %v323 = vsub.s32 0, %v322
        %v324 = vrot.slane %v272, %v323
        %v325 = vlaneseq
        %v326 = vshrl.u32 %v325, 7
        %v327 = vsub.s32 0, %v326
        %v328 = vrot.slane %v273, %v327
        %vm329 = vcmp.eq.s32.totalorder %v324, %v320
        %vm330 = vcmp.eq.s32.totalorder %v328, %v320
        %v331 = vld [vmem:[#allocation2] sm:$0xf]
        %v332 = vsel %vm329, %v317, 0.0
        %v333 = vsel %vm330, %v318, 0.0
        %v334 = vsel %vm274, %v332, 0.0
        %v335 = vsel %vm274, %v333, 0.0
        %v336 = vadd.f32 %v334, %v335
        %v337 = vadd.f32 %v331, %v336
        %338 = vst [vmem:[#allocation2] sm:$0xf] %v337
        %s339 = scalar_lea.vmem [#allocation2], 4
        %v340 = vld [vmem:[%s339] sm:$0xf]
        %v341 = vmul.f32 %v317, %v317
        %v342 = vmul.f32 %v318, %v318
        %v343 = vsel %vm274, %v341, 0.0
        %v344 = vsel %vm274, %v342, 0.0
        %v345 = vadd.f32 %v343, %v344
        %v346 = vadd.f32 %v340, %v345
        %347 = vst [vmem:[%s339] sm:$0xf] %v346
        %s348 = scalar_lea.vmem [#allocation2], 8
        %v349 = vld [vmem:[%s348] sm:$0xf]
        %v350 = vsel %vm329, 1.0, 0.0
        %v351 = vsel %vm330, 1.0, 0.0
        %v352 = vsel %vm274, %v350, 0.0
        %v353 = vsel %vm274, %v351, 0.0
        %v354 = vadd.f32 %v352, %v353
        %v355 = vadd.f32 %v349, %v354
        %356 = vst [vmem:[%s348] sm:$0xf] %v355
        // Predicated region
        $region108: #{per_class_dice.1} parent=94 // pred_check
          %p357 = pneg %p263
        $region109: #{per_class_dice.1} parent=94 // pred_check_branch
          %359 = sbr.rel (%p357) target = $region111
        $region110: #{per_class_dice.1} parent=94 // pred_region
          %v360 = vld [vmem:[#allocation2] sm:$0xf]
          %v361 = vld [vmem:[#allocation2 + $0x4] sm:$0xf]
          %v362 = vld [vmem:[#allocation2 + $0x8] sm:$0xf]
          %v363 = vsel %vm274, %v360, 0.0
          %364 = vadd.xlane.f32.xlu0 %v363
          %v365 = vpop.xlane.xlu0 %364
          %v366 = vsel %vm274, %v361, 0.0
          %367 = vadd.xlane.f32.xlu0 %v366
          %v368 = vpop.xlane.xlu0 %367
          %v369 = vsel %vm274, %v362, 0.0
          %370 = vadd.xlane.f32.xlu0 %v369
          %v371 = vpop.xlane.xlu0 %370
          %v375 = vlaneseq
          %v376 = vand.u32 %v375, 127
          %v377 = vlaneseq
          %v378 = vshrl.u32 %v377, 7
          %v379 = vsub.s32 %v376, %v378
          %v380 = vrot.slane %v365, %v379
          %v381 = vlaneseq
          %v382 = vshrl.u32 %v381, 7
          %v383 = vsub.s32 %v376, %v382
          %v384 = vrot.slane %v368, %v383
          %v385 = vlaneseq
          %v386 = vshrl.u32 %v385, 7
          %v387 = vsub.s32 %v376, %v386
          %v388 = vrot.slane %v371, %v387
          %vm389 = vcmask 1041409
          %v390 = vsel %vm389, %v384, %v380
          %vm391 = vcmask 1042434
          %v392 = vsel %vm391, %v388, %v390
          %vm394 = vcmask 26624
          %395 = vst.msk [vmem:[%s262] sm:$0x7] %vm394, %v392
        $region111: #{per_class_dice.1} parent=94 // pred_fallthru
          _
        %p396 = scmp.lt.s32.totalorder %s17, 1
        %s397 = scalar_select %p396, %s17, 1
        %s398 = smul.addr %s397, 4
        %s399 = scalar_lea.vmem %s2, %s398
        // Predicated region
        $region112: #{per_class_dice.1} parent=94 // pred_check
          %p400 = pneg %p99
        $region113: #{per_class_dice.1} parent=94 // pred_check_branch
          %402 = sbr.rel (%p400) target = $region115
        $region114: #{per_class_dice.1} parent=94 // pred_region
          _
        $region115: #{per_class_dice.1} parent=94 // pred_fallthru
          _
      $region95: #{per_class_dice.1} parent=5 // pred_fallthru
        _
      %p403 = scmp.le.s32.totalorder 2, %s8
      // Predicated region
      $region116: #{per_class_dice.1} parent=5 // pred_check
        %p404 = pneg %p403
      $region117: #{per_class_dice.1} parent=5 // pred_check_branch
        %406 = sbr.rel (%p404) target = $region119
      $region118: #{per_class_dice.1} parent=5 // pred_region
        %s407 = ssub.s32 %s8, 2
        // Predicated region
        $region120: #{per_class_dice.1} parent=118 // pred_check
          %p408 = pneg %p105
        $region121: #{per_class_dice.1} parent=118 // pred_check_branch
          %410 = sbr.rel (%p408) target = $region123
        $region122: #{per_class_dice.1} parent=118 // pred_region
          %p411 = scmp.lt.s32.totalorder %s19, 1
          %s412 = scalar_select %p411, %s19, 1
          %s413 = smul.addr %s412, 4
          %s414 = scalar_lea.vmem %s2, %s413
        $region123: #{per_class_dice.1} parent=118 // pred_fallthru
          _
      $region119: #{per_class_dice.1} parent=5 // pred_fallthru
        _
    $region6: #{per_class_dice.1} parent=1 // loop_footer
      %s12 = sadd.s32 1, %s8
    $region7: #{per_class_dice.1} parent=1 // loop_footer_branch
      %7 = sbr.rel target = $region3
    $region8: #{per_class_dice.1} parent=1 // loop_exit
      _

</llo_original>
